<compile_context>
chip_gen: v6e
topology: v6e:2x2x1
jax: 0.10.0
libtpu: 0.0.40
codegen_flags: <defaults>
</compile_context>

<pallas_src>
import jax
import jax.numpy as jnp
from jax.experimental import pallas as pl
from jax.experimental.pallas import tpu as pltpu

_LANES = 128


def _round_up(n, m):
    return ((n + m - 1) // m) * m


def make_slab_layout(input_dim, z_dim, mlp_dim, hidden_dim, mlp_hidden):
    """Static row offsets/sizes for the packed (total_rows, 128) f32 parameter slab."""
    d_set = input_dim + z_dim
    entries = [
        ("w1",     d_set,      mlp_hidden),
        ("b1",     1,          mlp_hidden),
        ("w2",     mlp_hidden, mlp_dim),
        ("b2",     1,          mlp_dim),
        ("we_x",   input_dim,  hidden_dim),
        ("we_s",   mlp_dim,    hidden_dim),
        ("be",     1,          hidden_dim),
        ("w_head", hidden_dim, 2 * z_dim),   # fused [wmu | wlv]
        ("b_head", 1,          2 * z_dim),   # fused [bmu | blv]
    ]
    layout = {}
    off = 0
    for name, r, c in entries:
        assert c <= _LANES
        layout[name] = (off, r, c)
        off += _round_up(r, 8)               # keep every entry sublane (8-row) aligned
    return layout, off


def pack_params(params, layout, total_rows):
    """Pack the individual (in, out) weights into one zero-padded (total_rows, 128) slab."""
    w_head = jnp.concatenate([params["wmu"], params["wlv"]], axis=1)
    b_head = jnp.concatenate([params["bmu"], params["blv"]], axis=1)
    tensors = dict(params, w_head=w_head, b_head=b_head)
    slab = jnp.zeros((total_rows, _LANES), jnp.float32)
    for name, (off, r, c) in layout.items():
        slab = slab.at[off:off + r, :c].set(tensors[name].astype(jnp.float32))
    return slab


def _make_kernel(layout, n_set):
    inv_n = 1.0 / float(n_set)

    def kernel(dset_ref, x_ref, slab_ref, out_ref):
        def ld(name):
            off, r, c = layout[name]          # static python ints -> free VMEM views
            return slab_ref[off:off + r, :c]

        # --- MeanMLPEncoder: per-point hidden layer, mean pooled BEFORE the affine
        #     second layer (algebraically identical, removes the N-scaled matmul). ---
        h = jnp.maximum(
            jnp.dot(dset_ref[...], ld("w1"), preferred_element_type=jnp.float32)
            + ld("b1"), 0.0)
        h_mean = jnp.sum(h, axis=0, keepdims=True) * inv_n            # (1, mlp_hidden)
        ss = (jnp.dot(h_mean, ld("w2"), preferred_element_type=jnp.float32)
              + ld("b2"))                                             # (1, mlp_dim)

        # --- GaussianEncoder on cat([x, ss], dim=1), folded into a split matmul:
        #     [x, ss] @ We == x @ We_x + ss @ We_s  (ss broadcasts over rows). ---
        pre = (jnp.dot(x_ref[...], ld("we_x"), preferred_element_type=jnp.float32)
               + jnp.dot(ss, ld("we_s"), preferred_element_type=jnp.float32)
               + ld("be"))
        he = jnp.maximum(pre, 0.0)

        # --- Fused mu/logvar heads: one matmul, one wider store. ---
        out_ref[...] = (jnp.dot(he, ld("w_head"), preferred_element_type=jnp.float32)
                        + ld("b_head"))

    return kernel


def inference_network_forward(x, dset, slab, layout, z_dim):
    """x: (B, input_dim) f32; dset: (1, N, input_dim+z_dim) f32; slab: packed params.

    Returns (z_mu, z_logvar), each (B, z_dim) f32.
    """
    dset2d = dset[0]                                   # (N, D) — glue reshape
    n_set = dset2d.shape[0]
    batch = x.shape[0]

    vmem_spec = pl.BlockSpec(memory_space=pltpu.MemorySpace.VMEM)
    fused = pl.pallas_call(
        _make_kernel(layout, n_set),
        out_shape=jax.ShapeDtypeStruct((batch, 2 * z_dim), jnp.float32),
        in_specs=[vmem_spec, vmem_spec, vmem_spec],
        out_specs=vmem_spec,
    )(dset2d, x, slab)

    return fused[:, :z_dim], fused[:, z_dim:]


def init_params(key, input_dim, z_dim, mlp_dim, hidden_dim, mlp_hidden):
    d_set = input_dim + z_dim
    keys = jax.random.split(key, 12)
    n = lambda k, shape: 0.1 * jax.random.normal(k, shape, jnp.float32)
    return {
        # MeanMLPEncoder
        "w1": n(keys[0], (d_set, mlp_hidden)),
        "b1": n(keys[1], (1, mlp_hidden)),
        "w2": n(keys[2], (mlp_hidden, mlp_dim)),
        "b2": n(keys[3], (1, mlp_dim)),
        # GaussianEncoder first layer, split into x-part and summary-statistic part
        "we_x": n(keys[4], (input_dim, hidden_dim)),
        "we_s": n(keys[5], (mlp_dim, hidden_dim)),
        "be": n(keys[6], (1, hidden_dim)),
        # Gaussian heads
        "wmu": n(keys[7], (hidden_dim, z_dim)),
        "bmu": n(keys[8], (1, z_dim)),
        "wlv": n(keys[9], (hidden_dim, z_dim)),
        "blv": n(keys[10], (1, z_dim)),
    }


def reference_forward(x, dset, p):
    """Pure-JAX reference matching the PyTorch semantics of the assumed submodules."""
    d = dset[0]
    h = jnp.maximum(d @ p["w1"] + p["b1"], 0.0)
    s = h @ p["w2"] + p["b2"]
    ss = jnp.mean(s, axis=0, keepdims=True)            # summary statistic
    x_ss = jnp.concatenate(
        [x, jnp.broadcast_to(ss, (x.shape[0], ss.shape[1]))], axis=1)
    we = jnp.concatenate([p["we_x"], p["we_s"]], axis=0)
    he = jnp.maximum(x_ss @ we + p["be"], 0.0)
    return he @ p["wmu"] + p["bmu"], he @ p["wlv"] + p["blv"]


if __name__ == "__main__":
    # Small shapes consistent with the module defaults (scaled up a touch for the TPU).
    input_dim, z_dim, mlp_dim, hidden_dim = 4, 4, 8, 32
    mlp_hidden = 16
    N = 16       # number of set points; also the batch of x (required by the cat on dim=1)

    key = jax.random.PRNGKey(0)
    k_dset, k_x, k_param = jax.random.split(key, 3)

    dset = jax.random.normal(k_dset, (1, N, input_dim + z_dim), jnp.float32)
    x = jax.random.normal(k_x, (N, input_dim), jnp.float32)
    params = init_params(k_param, input_dim, z_dim, mlp_dim, hidden_dim, mlp_hidden)

    layout, total_rows = make_slab_layout(input_dim, z_dim, mlp_dim, hidden_dim, mlp_hidden)
    slab = pack_params(params, layout, total_rows)

    z_mu, z_logvar = inference_network_forward(x, dset, slab, layout, z_dim)
    jax.block_until_ready((z_mu, z_logvar))

    mu_ref, lv_ref = reference_forward(x, dset, params)
    assert z_mu.shape == (N, z_dim) and z_logvar.shape == (N, z_dim)
    assert jnp.allclose(z_mu, mu_ref, atol=1e-5, rtol=1e-4)
    assert jnp.allclose(z_logvar, lv_ref, atol=1e-5, rtol=1e-4)

    print("KERNEL_OK")
</pallas_src>

<mosaic_0001>
module attributes {stable_mosaic.version = 11 : i64} {
  func.func @kernel(%arg0: memref<16x8xf32, #tpu.memory_space<vmem>>, %arg1: memref<16x4xf32, #tpu.memory_space<vmem>>, %arg2: memref<104x128xf32, #tpu.memory_space<vmem>>, %arg3: memref<16x8xf32, #tpu.memory_space<vmem>>) attributes {dimension_semantics = [], scalar_prefetch = 0 : i64, scratch_operands = 0 : i64, tpu.core_type = #tpu.core_type<tc>} {
    %c0 = arith.constant 0 : index
    %c0_0 = arith.constant 0 : index
    %0 = vector.load %arg0[%c0, %c0_0] : memref<16x8xf32, #tpu.memory_space<vmem>>, vector<16x8xf32>
    %c0_1 = arith.constant 0 : index
    %c0_2 = arith.constant 0 : index
    %1 = vector.load %arg2[%c0_1, %c0_2] : memref<104x128xf32, #tpu.memory_space<vmem>>, vector<8x16xf32>
    %cst = arith.constant dense<0.000000e+00> : vector<16x16xf32>
    %2 = tpu.matmul %0, %1, %cst {dimension_numbers = #tpu.dot_dimension_numbers<[1], [0], [0], [1], [0, 0, 1, 1], [], []>} : vector<16x8xf32>, vector<8x16xf32>, vector<16x16xf32> -> vector<16x16xf32>
    %c8 = arith.constant 8 : index
    %c0_3 = arith.constant 0 : index
    %3 = vector.load %arg2[%c8, %c0_3] : memref<104x128xf32, #tpu.memory_space<vmem>>, vector<1x16xf32>
    %4 = vector.broadcast %3 : vector<1x16xf32> to vector<16x16xf32>
    %5 = arith.addf %2, %4 : vector<16x16xf32>
    %cst_4 = arith.constant 0.000000e+00 : f32
    %6 = vector.broadcast %cst_4 : f32 to vector<16x16xf32>
    %7 = arith.maximumf %5, %6 : vector<16x16xf32>
    %cst_5 = arith.constant dense<0.000000e+00> : vector<16xf32>
    %8 = vector.multi_reduction <add>, %7, %cst_5 [0] : vector<16x16xf32> to vector<16xf32>
    %9 = vector.shape_cast %8 : vector<16xf32> to vector<1x16xf32>
    %cst_6 = arith.constant 6.250000e-02 : f32
    %10 = vector.broadcast %cst_6 : f32 to vector<1x16xf32>
    %11 = arith.mulf %9, %10 : vector<1x16xf32>
    %c16 = arith.constant 16 : index
    %c0_7 = arith.constant 0 : index
    %12 = vector.load %arg2[%c16, %c0_7] : memref<104x128xf32, #tpu.memory_space<vmem>>, vector<16x8xf32>
    %cst_8 = arith.constant dense<0.000000e+00> : vector<1x8xf32>
    %13 = tpu.matmul %11, %12, %cst_8 {dimension_numbers = #tpu.dot_dimension_numbers<[1], [0], [0], [1], [0, 0, 1, 1], [], []>} : vector<1x16xf32>, vector<16x8xf32>, vector<1x8xf32> -> vector<1x8xf32>
    %c32 = arith.constant 32 : index
    %c0_9 = arith.constant 0 : index
    %14 = vector.load %arg2[%c32, %c0_9] : memref<104x128xf32, #tpu.memory_space<vmem>>, vector<1x8xf32>
    %15 = arith.addf %13, %14 : vector<1x8xf32>
    %c0_10 = arith.constant 0 : index
    %c0_11 = arith.constant 0 : index
    %16 = vector.load %arg1[%c0_10, %c0_11] : memref<16x4xf32, #tpu.memory_space<vmem>>, vector<16x4xf32>
    %c40 = arith.constant 40 : index
    %c0_12 = arith.constant 0 : index
    %17 = vector.load %arg2[%c40, %c0_12] : memref<104x128xf32, #tpu.memory_space<vmem>>, vector<4x32xf32>
    %cst_13 = arith.constant dense<0.000000e+00> : vector<16x32xf32>
    %18 = tpu.matmul %16, %17, %cst_13 {dimension_numbers = #tpu.dot_dimension_numbers<[1], [0], [0], [1], [0, 0, 1, 1], [], []>} : vector<16x4xf32>, vector<4x32xf32>, vector<16x32xf32> -> vector<16x32xf32>
    %c48 = arith.constant 48 : index
    %c0_14 = arith.constant 0 : index
    %19 = vector.load %arg2[%c48, %c0_14] : memref<104x128xf32, #tpu.memory_space<vmem>>, vector<8x32xf32>
    %cst_15 = arith.constant dense<0.000000e+00> : vector<1x32xf32>
    %20 = tpu.matmul %15, %19, %cst_15 {dimension_numbers = #tpu.dot_dimension_numbers<[1], [0], [0], [1], [0, 0, 1, 1], [], []>} : vector<1x8xf32>, vector<8x32xf32>, vector<1x32xf32> -> vector<1x32xf32>
    %21 = vector.broadcast %20 : vector<1x32xf32> to vector<16x32xf32>
    %22 = arith.addf %18, %21 : vector<16x32xf32>
    %c56 = arith.constant 56 : index
    %c0_16 = arith.constant 0 : index
    %23 = vector.load %arg2[%c56, %c0_16] : memref<104x128xf32, #tpu.memory_space<vmem>>, vector<1x32xf32>
    %24 = vector.broadcast %23 : vector<1x32xf32> to vector<16x32xf32>
    %25 = arith.addf %22, %24 : vector<16x32xf32>
    %cst_17 = arith.constant 0.000000e+00 : f32
    %26 = vector.broadcast %cst_17 : f32 to vector<16x32xf32>
    %27 = arith.maximumf %25, %26 : vector<16x32xf32>
    %c64 = arith.constant 64 : index
    %c0_18 = arith.constant 0 : index
    %28 = vector.load %arg2[%c64, %c0_18] : memref<104x128xf32, #tpu.memory_space<vmem>>, vector<32x8xf32>
    %cst_19 = arith.constant dense<0.000000e+00> : vector<16x8xf32>
    %29 = tpu.matmul %27, %28, %cst_19 {dimension_numbers = #tpu.dot_dimension_numbers<[1], [0], [0], [1], [0, 0, 1, 1], [], []>} : vector<16x32xf32>, vector<32x8xf32>, vector<16x8xf32> -> vector<16x8xf32>
    %c96 = arith.constant 96 : index
    %c0_20 = arith.constant 0 : index
    %30 = vector.load %arg2[%c96, %c0_20] : memref<104x128xf32, #tpu.memory_space<vmem>>, vector<1x8xf32>
    %31 = vector.broadcast %30 : vector<1x8xf32> to vector<16x8xf32>
    %32 = arith.addf %29, %31 : vector<16x8xf32>
    %c0_21 = arith.constant 0 : index
    %c0_22 = arith.constant 0 : index
    %33 = vector.load %arg3[%c0_21, %c0_22] : memref<16x8xf32, #tpu.memory_space<vmem>>, vector<16x8xf32>
    tpu.vector_store %arg3[%c0_21, %c0_22], %32 {strides = array<i32>} : memref<16x8xf32, #tpu.memory_space<vmem>>, vector<16x8xf32>,
    return
  }
}

</mosaic_0001>

<llo_original>
// kernel: tpu_custom_call.1
$region0: #{tpu_custom_call.1}
  #allocation0 [shape = 'u32[]', space=smem, size = 0x4, offset = 0x4, fixed_abs, tag = 'smem constant byte address 0x4 - core index']
  #allocation1 [shape = 'u32[144,128]{1,0:T(1,128)}', space=vmem, size = 0x12000, scoped, tag = 'internal scratch']
  %s0 = inlined_call_operand.vmem [shape: f32[16,8], index: 0, kind: input, shape index: {}]
  %s1 = inlined_call_operand.vmem [shape: f32[16,4], index: 1, kind: input, shape index: {}]
  %s2 = inlined_call_operand.hbm [shape: f32[104,128], index: 2, kind: input, shape index: {}]
  %s3 = inlined_call_operand.vmem [shape: f32[16,8], index: 3, kind: output, shape index: {}]
  %s4 = sld [smem:[#allocation0]]
  $region26: #{tpu_custom_call.1} parent=0
    _
  %s6 = ssub.s32 1, %s4
  %s7 = scalar_select 0, %s6, %s4
  $region1: #{tpu_custom_call.1} parent=0
    #allocation2 [shape = 'u8[53248]{0}', space=vmem, size = 0xd000, scoped, tag = 'input window, operand 2, single buffered']
    #allocation3 [shape = 's32[1]{0}', space=sflag, size = 0x4, scoped, tag = 'scoped memory for tpu_custom_call.1']
    %8 = vsyncpa [#allocation3], 0
    // Predicated region
    $region2: #{tpu_custom_call.1} parent=1 // pred_check
      _
    $region3: #{tpu_custom_call.1} parent=1 // pred_check_branch
      %10 = sbr.rel (0) target = $region5
    $region4: #{tpu_custom_call.1} parent=1 // pred_region
      _
    $region5: #{tpu_custom_call.1} parent=1 // pred_fallthru
      _
    // Predicated region
    $region6: #{tpu_custom_call.1} parent=1 // pred_check
      _
    $region7: #{tpu_custom_call.1} parent=1 // pred_check_branch
      %12 = sbr.rel (0) target = $region9
    $region8: #{tpu_custom_call.1} parent=1 // pred_region
      _
    $region9: #{tpu_custom_call.1} parent=1 // pred_fallthru
      _
    // Predicated region
    $region10: #{tpu_custom_call.1} parent=1 // pred_check
      _
    $region11: #{tpu_custom_call.1} parent=1 // pred_check_branch
      %14 = sbr.rel (0) target = $region13
    $region12: #{tpu_custom_call.1} parent=1 // pred_region
      %s16 = ssub.s32 1664, 1664
      %17 = vsyncadd [#allocation3], %s16
      %s18 = sshll.u32 [#allocation2], 4
      %s19 = int_to_ptr.vmem [resolvable:$true] %s18
      %24 = dma.hbm_to_vmem [thread:$0]  %s2, 1664, %s19, [#allocation3], 128, 128, 8
    $region13: #{tpu_custom_call.1} parent=1 // pred_fallthru
      _
    // Predicated region
    $region14: #{tpu_custom_call.1} parent=1 // pred_check
      _
    $region15: #{tpu_custom_call.1} parent=1 // pred_check_branch
      %26 = sbr.rel (0) target = $region17
    $region16: #{tpu_custom_call.1} parent=1 // pred_region
      %27 = dma.done [#allocation3], 1664
    $region17: #{tpu_custom_call.1} parent=1 // pred_fallthru
      _
    %v28 = vld [vmem:[%s0] sm:$0xff]
    %v29 = vld [vmem:[%s0 + $0x8] sm:$0xff]
    %v30 = vld [vmem:[#allocation2] sm:$0xff]
    %v31 = vld [vmem:[#allocation2 + $0x8] sm:$0x1]
    %v32 = vlaneseq
    %v33 = vshrl.u32 %v32, 7
    %v34 = vsub.s32 0, %v33
    %v35 = vrot.slane %v31, %v34
    %vm36 = vcmask 64512
    %v38 = vsel %vm36, %v28, 0
    %v41 = vsel %vm36, %v29, 0
    %43 = vmatprep.subr.mxu0 0.0
    %44 = vmatpush1.msra.mxu0 0.0
    %45 = vmatprep.subr.mxu0 0.0
    %46 = vmatpush1.msra.mxu0 0.0
    %47 = vmatprep.subr.mxu0 0.0
    %48 = vmatpush1.msra.mxu0 0.0
    %49 = vmatprep.subr.mxu0 0.0
    %50 = vmatpush1.msra.mxu0 0.0
    %51 = vmatprep.subr.mxu0 0.0
    %52 = vmatpush1.msra.mxu0 0.0
    %53 = vmatprep.subr.mxu0 0.0
    %54 = vmatpush1.msra.mxu0 0.0
    %55 = vmatprep.subr.mxu0 0.0
    %56 = vmatpush1.msra.mxu0 0.0
    %57 = vmatprep.subr.mxu0 0.0
    %58 = vmatpush1.msra.mxu0 0.0
    %59 = vmatprep.subr.mxu0 0.0
    %60 = vmatpush1.msra.mxu0 0.0
    %61 = vmatprep.subr.mxu0 0.0
    %62 = vmatpush1.msra.mxu0 0.0
    %63 = vmatprep.subr.mxu0 0.0
    %64 = vmatpush1.msra.mxu0 0.0
    %65 = vmatprep.subr.mxu0 0.0
    %66 = vmatpush1.msra.mxu0 0.0
    %67 = vmatprep.subr.mxu0 0.0
    %68 = vmatpush1.msra.mxu0 0.0
    %69 = vmatprep.subr.mxu0 0.0
    %70 = vmatpush1.msra.mxu0 0.0
    %71 = vmatprep.subr.mxu0 0.0
    %72 = vmatpush1.msra.mxu0 0.0
    %73 = vmatprep.subr.mxu0 0.0
    %74 = vmatpush1.msra.mxu0 %v30
    %75 = vmatprep.subr.mxu0 0.0
    %76 = vmatpush2.msra.mxu0 0.0
    %77 = vmatprep.subr.mxu0 0.0
    %78 = vmatpush2.msra.mxu0 0.0
    %79 = vmatprep.subr.mxu0 0.0
    %80 = vmatpush2.msra.mxu0 0.0
    %81 = vmatprep.subr.mxu0 0.0
    %82 = vmatpush2.msra.mxu0 0.0
    %83 = vmatprep.subr.mxu0 0.0
    %84 = vmatpush2.msra.mxu0 0.0
    %85 = vmatprep.subr.mxu0 0.0
    %86 = vmatpush2.msra.mxu0 0.0
    %87 = vmatprep.subr.mxu0 0.0
    %88 = vmatpush2.msra.mxu0 0.0
    %89 = vmatprep.subr.mxu0 0.0
    %90 = vmatpush2.msra.mxu0 0.0
    %91 = vmatprep.subr.mxu0 0.0
    %92 = vmatpush2.msra.mxu0 0.0
    %93 = vmatprep.subr.mxu0 0.0
    %94 = vmatpush2.msra.mxu0 0.0
    %95 = vmatprep.subr.mxu0 0.0
    %96 = vmatpush2.msra.mxu0 0.0
    %97 = vmatprep.subr.mxu0 0.0
    %98 = vmatpush2.msra.mxu0 0.0
    %99 = vmatprep.subr.mxu0 0.0
    %100 = vmatpush2.msra.mxu0 0.0
    %101 = vmatprep.subr.mxu0 0.0
    %102 = vmatpush2.msra.mxu0 0.0
    %103 = vmatprep.subr.mxu0 0.0
    %104 = vmatpush2.msra.mxu0 0.0
    %105 = vmatprep.subr.mxu0 0.0
    %106 = vmatpush2.msra.mxu0 0.0
    %107 = vmatprep.mubr.f32.mxu0 0.0
    %108 = vmatmul.mubr.f32.gmra.mxu0 %v38
    %v109 = vpop.f32.mrf.mxu0
    %v110 = vadd.f32 %v35, %v109
    %v111 = vpop.f32.mrf.mxu0
    %112 = vmatprep.mubr.f32.mxu0 0.0
    %113 = vmatmul.mubr.f32.gmra.mxu0 %v41
    %v114 = vpop.f32.mrf.mxu0
    %v115 = vadd.f32 %v35, %v114
    %v116 = vpop.f32.mrf.mxu0
    %117 = vdwg.mxu0
    %v118 = vmax.f32 %v110, 0.0
    %v119 = vmax.f32 %v115, 0.0
    %vm120 = vcmask 130048
    %v121 = vsel %vm120, %v118, 0.0
    %v122 = vsel %vm120, %v119, 0.0
    %v123 = vadd.f32 %v121, %v122
    %v124 = vrot.slane %v123, 4
    %v125 = vadd.f32 %v123, %v124
    %v126 = vrot.slane %v125, 2
    %v127 = vadd.f32 %v125, %v126
    %v128 = vrot.slane %v127, 1
    %v129 = vadd.f32 %v127, %v128
    %v130 = vmul.f32 %v129, 0.0625
    %v131 = vld [vmem:[#allocation2 + $0x10] sm:$0xff]
    %v132 = vld [vmem:[#allocation2 + $0x18] sm:$0xff]
    %v133 = vld [vmem:[#allocation2 + $0x20] sm:$0x1]
    %v135 = vsel %vm120, %v130, 0
    %137 = vmatprep.subr.mxu0 0.0
    %138 = vmatpush1.msra.mxu0 0.0
    %139 = vmatprep.subr.mxu0 0.0
    %140 = vmatpush1.msra.mxu0 0.0
    %141 = vmatprep.subr.mxu0 0.0
    %142 = vmatpush1.msra.mxu0 0.0
    %143 = vmatprep.subr.mxu0 0.0
    %144 = vmatpush1.msra.mxu0 0.0
    %145 = vmatprep.subr.mxu0 0.0
    %146 = vmatpush1.msra.mxu0 0.0
    %147 = vmatprep.subr.mxu0 0.0
    %148 = vmatpush1.msra.mxu0 0.0
    %149 = vmatprep.subr.mxu0 0.0
    %150 = vmatpush1.msra.mxu0 0.0
    %151 = vmatprep.subr.mxu0 0.0
    %152 = vmatpush1.msra.mxu0 0.0
    %153 = vmatprep.subr.mxu0 0.0
    %154 = vmatpush1.msra.mxu0 0.0
    %155 = vmatprep.subr.mxu0 0.0
    %156 = vmatpush1.msra.mxu0 0.0
    %157 = vmatprep.subr.mxu0 0.0
    %158 = vmatpush1.msra.mxu0 0.0
    %159 = vmatprep.subr.mxu0 0.0
    %160 = vmatpush1.msra.mxu0 0.0
    %161 = vmatprep.subr.mxu0 0.0
    %162 = vmatpush1.msra.mxu0 0.0
    %163 = vmatprep.subr.mxu0 0.0
    %164 = vmatpush1.msra.mxu0 0.0
    %165 = vmatprep.subr.mxu0 0.0
    %166 = vmatpush1.msra.mxu0 %v132
    %167 = vmatprep.subr.mxu0 0.0
    %168 = vmatpush1.msra.mxu0 %v131
    %169 = vmatprep.subr.mxu0 0.0
    %170 = vmatpush2.msra.mxu0 0.0
    %171 = vmatprep.subr.mxu0 0.0
    %172 = vmatpush2.msra.mxu0 0.0
    %173 = vmatprep.subr.mxu0 0.0
    %174 = vmatpush2.msra.mxu0 0.0
    %175 = vmatprep.subr.mxu0 0.0
    %176 = vmatpush2.msra.mxu0 0.0
    %177 = vmatprep.subr.mxu0 0.0
    %178 = vmatpush2.msra.mxu0 0.0
    %179 = vmatprep.subr.mxu0 0.0
    %180 = vmatpush2.msra.mxu0 0.0
    %181 = vmatprep.subr.mxu0 0.0
    %182 = vmatpush2.msra.mxu0 0.0
    %183 = vmatprep.subr.mxu0 0.0
    %184 = vmatpush2.msra.mxu0 0.0
    %185 = vmatprep.subr.mxu0 0.0
    %186 = vmatpush2.msra.mxu0 0.0
    %187 = vmatprep.subr.mxu0 0.0
    %188 = vmatpush2.msra.mxu0 0.0
    %189 = vmatprep.subr.mxu0 0.0
    %190 = vmatpush2.msra.mxu0 0.0
    %191 = vmatprep.subr.mxu0 0.0
    %192 = vmatpush2.msra.mxu0 0.0
    %193 = vmatprep.subr.mxu0 0.0
    %194 = vmatpush2.msra.mxu0 0.0
    %195 = vmatprep.subr.mxu0 0.0
    %196 = vmatpush2.msra.mxu0 0.0
    %197 = vmatprep.subr.mxu0 0.0
    %198 = vmatpush2.msra.mxu0 0.0
    %199 = vmatprep.subr.mxu0 0.0
    %200 = vmatpush2.msra.mxu0 0.0
    %201 = vmatprep.mubr.f32.mxu0 0.0
    %202 = vmatmul.mubr.f32.gmra.mxu0 %v135
    %v203 = vpop.f32.mrf.mxu0
    %v204 = vadd.f32 %v133, %v203
    %v205 = vpop.f32.mrf.mxu0
    %206 = vdwg.mxu0
    %v207 = vld [vmem:[%s1] sm:$0xff]
    %v208 = vld [vmem:[%s1 + $0x8] sm:$0xff]
    %v209 = vld [vmem:[#allocation2 + $0x28] sm:$0xf]
    %v210 = vld [vmem:[#allocation2 + $0x30] sm:$0xff]
    %v212 = vsel %vm36, %v204, 0
    %214 = vmatprep.subr.mxu0 0.0
    %215 = vmatpush1.msra.mxu0 0.0
    %216 = vmatprep.subr.mxu0 0.0
    %217 = vmatpush1.msra.mxu0 0.0
    %218 = vmatprep.subr.mxu0 0.0
    %219 = vmatpush1.msra.mxu0 0.0
    %220 = vmatprep.subr.mxu0 0.0
    %221 = vmatpush1.msra.mxu0 0.0
    %222 = vmatprep.subr.mxu0 0.0
    %223 = vmatpush1.msra.mxu0 0.0
    %224 = vmatprep.subr.mxu0 0.0
    %225 = vmatpush1.msra.mxu0 0.0
    %226 = vmatprep.subr.mxu0 0.0
    %227 = vmatpush1.msra.mxu0 0.0
    %228 = vmatprep.subr.mxu0 0.0
    %229 = vmatpush1.msra.mxu0 0.0
    %230 = vmatprep.subr.mxu0 0.0
    %231 = vmatpush1.msra.mxu0 0.0
    %232 = vmatprep.subr.mxu0 0.0
    %233 = vmatpush1.msra.mxu0 0.0
    %234 = vmatprep.subr.mxu0 0.0
    %235 = vmatpush1.msra.mxu0 0.0
    %236 = vmatprep.subr.mxu0 0.0
    %237 = vmatpush1.msra.mxu0 0.0
    %238 = vmatprep.subr.mxu0 0.0
    %239 = vmatpush1.msra.mxu0 0.0
    %240 = vmatprep.subr.mxu0 0.0
    %241 = vmatpush1.msra.mxu0 0.0
    %242 = vmatprep.subr.mxu0 0.0
    %243 = vmatpush1.msra.mxu0 0.0
    %244 = vmatprep.subr.mxu0 0.0
    %245 = vmatpush1.msra.mxu0 %v210
    %246 = vmatprep.subr.mxu0 0.0
    %247 = vmatpush2.msra.mxu0 0.0
    %248 = vmatprep.subr.mxu0 0.0
    %249 = vmatpush2.msra.mxu0 0.0
    %250 = vmatprep.subr.mxu0 0.0
    %251 = vmatpush2.msra.mxu0 0.0
    %252 = vmatprep.subr.mxu0 0.0
    %253 = vmatpush2.msra.mxu0 0.0
    %254 = vmatprep.subr.mxu0 0.0
    %255 = vmatpush2.msra.mxu0 0.0
    %256 = vmatprep.subr.mxu0 0.0
    %257 = vmatpush2.msra.mxu0 0.0
    %258 = vmatprep.subr.mxu0 0.0
    %259 = vmatpush2.msra.mxu0 0.0
    %260 = vmatprep.subr.mxu0 0.0
    %261 = vmatpush2.msra.mxu0 0.0
    %262 = vmatprep.subr.mxu0 0.0
    %263 = vmatpush2.msra.mxu0 0.0
    %264 = vmatprep.subr.mxu0 0.0
    %265 = vmatpush2.msra.mxu0 0.0
    %266 = vmatprep.subr.mxu0 0.0
    %267 = vmatpush2.msra.mxu0 0.0
    %268 = vmatprep.subr.mxu0 0.0
    %269 = vmatpush2.msra.mxu0 0.0
    %270 = vmatprep.subr.mxu0 0.0
    %271 = vmatpush2.msra.mxu0 0.0
    %272 = vmatprep.subr.mxu0 0.0
    %273 = vmatpush2.msra.mxu0 0.0
    %274 = vmatprep.subr.mxu0 0.0
    %275 = vmatpush2.msra.mxu0 0.0
    %276 = vmatprep.subr.mxu0 0.0
    %277 = vmatpush2.msra.mxu0 0.0
    %278 = vmatprep.mubr.f32.mxu0 0.0
    %279 = vmatmul.mubr.f32.gmra.mxu0 %v212
    %v280 = vpop.f32.mrf.mxu0
    %v281 = vadd.f32 0.0, %v280
    %v282 = vpop.f32.mrf.mxu0
    %283 = vdwg.mxu0
    %v284 = vlaneseq
    %v285 = vshrl.u32 %v284, 7
    %v286 = vsub.s32 0, %v285
    %v287 = vrot.slane %v281, %v286
    %vm288 = vcmask 31744
    %v290 = vsel %vm288, %v207, 0
    %v293 = vsel %vm288, %v208, 0
    %vm295 = vcmask 1043456
    %v297 = vsel %vm295, %v209, 0
    %299 = vmatprep.subr.mxu0 0.0
    %300 = vmatpush1.msra.mxu0 0.0
    %301 = vmatprep.subr.mxu0 0.0
    %302 = vmatpush1.msra.mxu0 0.0
    %303 = vmatprep.subr.mxu0 0.0
    %304 = vmatpush1.msra.mxu0 0.0
    %305 = vmatprep.subr.mxu0 0.0
    %306 = vmatpush1.msra.mxu0 0.0
    %307 = vmatprep.subr.mxu0 0.0
    %308 = vmatpush1.msra.mxu0 0.0
    %309 = vmatprep.subr.mxu0 0.0
    %310 = vmatpush1.msra.mxu0 0.0
    %311 = vmatprep.subr.mxu0 0.0
    %312 = vmatpush1.msra.mxu0 0.0
    %313 = vmatprep.subr.mxu0 0.0
    %314 = vmatpush1.msra.mxu0 0.0
    %315 = vmatprep.subr.mxu0 0.0
    %316 = vmatpush1.msra.mxu0 0.0
    %317 = vmatprep.subr.mxu0 0.0
    %318 = vmatpush1.msra.mxu0 0.0
    %319 = vmatprep.subr.mxu0 0.0
    %320 = vmatpush1.msra.mxu0 0.0
    %321 = vmatprep.subr.mxu0 0.0
    %322 = vmatpush1.msra.mxu0 0.0
    %323 = vmatprep.subr.mxu0 0.0
    %324 = vmatpush1.msra.mxu0 0.0
    %325 = vmatprep.subr.mxu0 0.0
    %326 = vmatpush1.msra.mxu0 0.0
    %327 = vmatprep.subr.mxu0 0.0
    %328 = vmatpush1.msra.mxu0 0.0
    %329 = vmatprep.subr.mxu0 0.0
    %330 = vmatpush1.msra.mxu0 %v297
    %331 = vmatprep.subr.mxu0 0.0
    %332 = vmatpush2.msra.mxu0 0.0
    %333 = vmatprep.subr.mxu0 0.0
    %334 = vmatpush2.msra.mxu0 0.0
    %335 = vmatprep.subr.mxu0 0.0
    %336 = vmatpush2.msra.mxu0 0.0
    %337 = vmatprep.subr.mxu0 0.0
    %338 = vmatpush2.msra.mxu0 0.0
    %339 = vmatprep.subr.mxu0 0.0
    %340 = vmatpush2.msra.mxu0 0.0
    %341 = vmatprep.subr.mxu0 0.0
    %342 = vmatpush2.msra.mxu0 0.0
    %343 = vmatprep.subr.mxu0 0.0
    %344 = vmatpush2.msra.mxu0 0.0
    %345 = vmatprep.subr.mxu0 0.0
    %346 = vmatpush2.msra.mxu0 0.0
    %347 = vmatprep.subr.mxu0 0.0
    %348 = vmatpush2.msra.mxu0 0.0
    %349 = vmatprep.subr.mxu0 0.0
    %350 = vmatpush2.msra.mxu0 0.0
    %351 = vmatprep.subr.mxu0 0.0
    %352 = vmatpush2.msra.mxu0 0.0
    %353 = vmatprep.subr.mxu0 0.0
    %354 = vmatpush2.msra.mxu0 0.0
    %355 = vmatprep.subr.mxu0 0.0
    %356 = vmatpush2.msra.mxu0 0.0
    %357 = vmatprep.subr.mxu0 0.0
    %358 = vmatpush2.msra.mxu0 0.0
    %359 = vmatprep.subr.mxu0 0.0
    %360 = vmatpush2.msra.mxu0 0.0
    %361 = vmatprep.subr.mxu0 0.0
    %362 = vmatpush2.msra.mxu0 0.0
    %363 = vmatprep.mubr.f32.mxu0 0.0
    %364 = vmatmul.mubr.f32.gmra.mxu0 %v290
    %v365 = vpop.f32.mrf.mxu0
    %v366 = vadd.f32 %v287, %v365
    %v367 = vpop.f32.mrf.mxu0
    %368 = vmatprep.mubr.f32.mxu0 0.0
    %369 = vmatmul.mubr.f32.gmra.mxu0 %v293
    %v370 = vpop.f32.mrf.mxu0
    %v371 = vadd.f32 %v287, %v370
    %v372 = vpop.f32.mrf.mxu0
    %373 = vdwg.mxu0
    %v374 = vld [vmem:[#allocation2 + $0x38] sm:$0x1]
    %v375 = vlaneseq
    %v376 = vshrl.u32 %v375, 7
    %v377 = vsub.s32 0, %v376
    %v378 = vrot.slane %v374, %v377
    %v379 = vadd.f32 %v366, %v378
    %v380 = vadd.f32 %v371, %v378
    %v381 = vmax.f32 %v379, 0.0
    %v382 = vmax.f32 %v380, 0.0
    %v383 = vld [vmem:[#allocation2 + $0x40] sm:$0xff]
    %v384 = vld [vmem:[#allocation2 + $0x48] sm:$0xff]
    %v385 = vld [vmem:[#allocation2 + $0x50] sm:$0xff]
    %v386 = vld [vmem:[#allocation2 + $0x58] sm:$0xff]
    %v387 = vld [vmem:[#allocation2 + $0x60] sm:$0x1]
    %v388 = vlaneseq
    %v389 = vshrl.u32 %v388, 7
    %v390 = vsub.s32 0, %v389
    %v391 = vrot.slane %v387, %v390
    %vm392 = vcmask 261120
    %v394 = vsel %vm392, %v381, 0
    %v397 = vsel %vm392, %v382, 0
    %399 = vmatprep.subr.mxu0 0.0
    %400 = vmatpush1.msra.mxu0 0.0
    %401 = vmatprep.subr.mxu0 0.0
    %402 = vmatpush1.msra.mxu0 0.0
    %403 = vmatprep.subr.mxu0 0.0
    %404 = vmatpush1.msra.mxu0 0.0
    %405 = vmatprep.subr.mxu0 0.0
    %406 = vmatpush1.msra.mxu0 0.0
    %407 = vmatprep.subr.mxu0 0.0
    %408 = vmatpush1.msra.mxu0 0.0
    %409 = vmatprep.subr.mxu0 0.0
    %410 = vmatpush1.msra.mxu0 0.0
    %411 = vmatprep.subr.mxu0 0.0
    %412 = vmatpush1.msra.mxu0 0.0
    %413 = vmatprep.subr.mxu0 0.0
    %414 = vmatpush1.msra.mxu0 0.0
    %415 = vmatprep.subr.mxu0 0.0
    %416 = vmatpush1.msra.mxu0 0.0
    %417 = vmatprep.subr.mxu0 0.0
    %418 = vmatpush1.msra.mxu0 0.0
    %419 = vmatprep.subr.mxu0 0.0
    %420 = vmatpush1.msra.mxu0 0.0
    %421 = vmatprep.subr.mxu0 0.0
    %422 = vmatpush1.msra.mxu0 0.0
    %423 = vmatprep.subr.mxu0 0.0
    %424 = vmatpush1.msra.mxu0 %v386
    %425 = vmatprep.subr.mxu0 0.0
    %426 = vmatpush1.msra.mxu0 %v385
    %427 = vmatprep.subr.mxu0 0.0
    %428 = vmatpush1.msra.mxu0 %v384
    %429 = vmatprep.subr.mxu0 0.0
    %430 = vmatpush1.msra.mxu0 %v383
    %431 = vmatprep.subr.mxu0 0.0
    %432 = vmatpush2.msra.mxu0 0.0
    %433 = vmatprep.subr.mxu0 0.0
    %434 = vmatpush2.msra.mxu0 0.0
    %435 = vmatprep.subr.mxu0 0.0
    %436 = vmatpush2.msra.mxu0 0.0
    %437 = vmatprep.subr.mxu0 0.0
    %438 = vmatpush2.msra.mxu0 0.0
    %439 = vmatprep.subr.mxu0 0.0
    %440 = vmatpush2.msra.mxu0 0.0
    %441 = vmatprep.subr.mxu0 0.0
    %442 = vmatpush2.msra.mxu0 0.0
    %443 = vmatprep.subr.mxu0 0.0
    %444 = vmatpush2.msra.mxu0 0.0
    %445 = vmatprep.subr.mxu0 0.0
    %446 = vmatpush2.msra.mxu0 0.0
    %447 = vmatprep.subr.mxu0 0.0
    %448 = vmatpush2.msra.mxu0 0.0
    %449 = vmatprep.subr.mxu0 0.0
    %450 = vmatpush2.msra.mxu0 0.0
    %451 = vmatprep.subr.mxu0 0.0
    %452 = vmatpush2.msra.mxu0 0.0
    %453 = vmatprep.subr.mxu0 0.0
    %454 = vmatpush2.msra.mxu0 0.0
    %455 = vmatprep.subr.mxu0 0.0
    %456 = vmatpush2.msra.mxu0 0.0
    %457 = vmatprep.subr.mxu0 0.0
    %458 = vmatpush2.msra.mxu0 0.0
    %459 = vmatprep.subr.mxu0 0.0
    %460 = vmatpush2.msra.mxu0 0.0
    %461 = vmatprep.subr.mxu0 0.0
    %462 = vmatpush2.msra.mxu0 0.0
    %463 = vmatprep.mubr.f32.mxu0 0.0
    %464 = vmatmul.mubr.f32.gmra.mxu0 %v394
    %v465 = vpop.f32.mrf.mxu0
    %v466 = vadd.f32 %v391, %v465
    %v467 = vpop.f32.mrf.mxu0
    %468 = vmatprep.mubr.f32.mxu0 0.0
    %469 = vmatmul.mubr.f32.gmra.mxu0 %v397
    %v470 = vpop.f32.mrf.mxu0
    %v471 = vadd.f32 %v391, %v470
    %v472 = vpop.f32.mrf.mxu0
    %473 = vdwg.mxu0
    %474 = vst.msk [vmem:[%s3] sm:$0xff] %vm36, %v466
    %475 = vst.msk [vmem:[%s3 + $0x8] sm:$0xff] %vm36, %v471
    // Predicated region
    $region18: #{tpu_custom_call.1} parent=1 // pred_check
      _
    $region19: #{tpu_custom_call.1} parent=1 // pred_check_branch
      %477 = sbr.rel (0) target = $region21
    $region20: #{tpu_custom_call.1} parent=1 // pred_region
      _
    $region21: #{tpu_custom_call.1} parent=1 // pred_fallthru
      _
    // Predicated region
    $region22: #{tpu_custom_call.1} parent=1 // pred_check
      _
    $region23: #{tpu_custom_call.1} parent=1 // pred_check_branch
      %479 = sbr.rel (0) target = $region25
    $region24: #{tpu_custom_call.1} parent=1 // pred_region
      _
    $region25: #{tpu_custom_call.1} parent=1 // pred_fallthru
      _
    %480 = vsyncpa [#allocation3], 1

</llo_original>
